<compile_context>
chip_gen: v7x
topology: tpu7x:2x2x1
jax: 0.10.0
libtpu: 0.0.40
codegen_flags: <defaults>
</compile_context>

<pallas_src>
from functools import partial

import jax
import jax.numpy as jnp
from jax.experimental import pallas as pl
from jax.experimental.pallas import tpu as pltpu


def _write_partials(out_ref, diff):
    """Reduce the Gram difference to the two ScaledMSE partial sums and emit
    them into a lane-dense (8, 128) output block (lane 0: sum(diff^2),
    lane 1: sum(|diff|))."""
    sq = jnp.sum(diff * diff)
    ab = jnp.sum(jnp.abs(diff))
    lane = jax.lax.broadcasted_iota(jnp.int32, (8, 128), 1)
    out_ref[...] = jnp.where(lane == 0, sq, jnp.where(lane == 1, ab, 0.0))


def _style_loss_kernel(x_ref, tgt_ref, out_ref, *acc, inv_n, hw, tk, has_tail):
    k = pl.program_id(1)

    x = x_ref[...]  # (C, tk), native dtype
    if has_tail:
        # Ragged last HW tile: out-of-bounds buffer contents are undefined, so
        # zero the invalid lanes before they hit the MXU.
        lane = jax.lax.broadcasted_iota(jnp.int32, x.shape, 1)
        x = jnp.where(k * tk + lane < hw, x, jnp.zeros_like(x))

    # Partial Gram on the MXU: contract the last (lane) dim of both operands,
    # f32 accumulation, no transpose of the streaming operand.
    gram = jax.lax.dot_general(
        x, x,
        dimension_numbers=(((1,), (1,)), ((), ())),
        preferred_element_type=jnp.float32,
    )

    if not acc:
        # Single K tile: no accumulator round-trip needed.
        _write_partials(out_ref, gram * inv_n - tgt_ref[...])
        return

    acc_ref, = acc

    @pl.when(k == 0)
    def _():
        acc_ref[...] = gram            # direct store: no zero-fill pass

    @pl.when(k > 0)
    def _():
        acc_ref[...] += gram

    @pl.when(k == pl.num_programs(1) - 1)
    def _():
        # Apply the 1/(H*W) scale once, diff against the resident target Gram.
        _write_partials(out_ref, acc_ref[...] * inv_n - tgt_ref[...])


def _vmem_capacity_bytes():
    try:
        info = pltpu.get_tpu_info()
        cap = getattr(info, "vmem_capacity_bytes", None)
        if cap:
            return int(cap)
    except Exception:
        pass
    return 64 * 1024 * 1024   # conservative fallback (v7x per-TC VMEM)


def _choose_tk(C, HW, itemsize, budget_bytes):
    """Largest lane-dense (128-multiple) HW tile that fits the VMEM budget."""
    # Resident: f32 accumulator (C*C*4) + double-buffered target Gram
    # (2*C*C*4) + two tiny (8,128) output buffers; the remainder goes to the
    # double-buffered (C, tk) feature stream.
    fixed = 3 * C * C * 4 + 2 * 8 * 128 * 4
    avail = max(budget_bytes - fixed, 2 * C * itemsize * 128)
    tk = avail // (2 * C * itemsize)
    tk = max(128, (tk // 128) * 128)
    if HW <= tk:
        if HW <= 128 or HW % 128 == 0:
            return HW                     # single full-extent tile
        return (HW // 128) * 128          # keep tiles lane-dense; mask the tail
    return tk


def style_loss(x_nchw, target_gram, eps=1e-8, tk_override=None, cast_to_bf16=False):
    """StyleLoss.forward: ScaledMSE(Gram(x)/(H*W), target_gram)."""
    B, C, H, W = x_nchw.shape
    HW = H * W
    inv_n = 1.0 / float(HW)

    x = x_nchw.reshape(B, C, HW)            # native dtype, no pad / extra HBM copy
    if cast_to_bf16 and x.dtype == jnp.float32:
        # MXU is bf16-native on v6e/v7x; accumulation stays f32.
        # TODO(synk): validate Gram numerics in bf16 before enabling by default.
        x = x.astype(jnp.bfloat16)
    tgt = target_gram.astype(jnp.float32)
    assert tgt.shape == (B, C, C)

    vmem_cap = _vmem_capacity_bytes()
    vmem_limit = int(vmem_cap * 0.75)
    if tk_override is not None:
        tk = int(tk_override)
    else:
        tk = _choose_tk(C, HW, x.dtype.itemsize, int(vmem_limit * 0.8))
    kt = -(-HW // tk)
    has_tail = (HW % tk) != 0
    single_tile = (kt == 1)

    kernel = partial(_style_loss_kernel, inv_n=inv_n, hw=HW, tk=tk,
                     has_tail=has_tail)

    cost = pl.CostEstimate(
        flops=2 * B * C * C * HW,
        transcendentals=0,
        bytes_accessed=(B * C * HW * x.dtype.itemsize
                        + B * C * C * 4
                        + B * 8 * 128 * 4),
    )

    partials = pl.pallas_call(
        kernel,
        out_shape=jax.ShapeDtypeStruct((B, 8, 128), jnp.float32),
        grid_spec=pltpu.PrefetchScalarGridSpec(
            num_scalar_prefetch=0,
            grid=(B, kt),
            in_specs=[
                # streaming feature tiles: advance along HW with k; C stays
                # unpadded (block dim == full array dim is legal).
                pl.BlockSpec((None, C, tk), lambda b, k: (b, 0, k)),
                # target Gram: k-invariant index -> fetched once per batch,
                # resident across the whole K reduction.
                pl.BlockSpec((None, C, C), lambda b, k: (b, 0, 0)),
            ],
            # lane-dense per-batch partial sums (written on the last k step)
            out_specs=pl.BlockSpec((None, 8, 128), lambda b, k: (b, 0, 0)),
            scratch_shapes=([] if single_tile
                            else [pltpu.VMEM((C, C), jnp.float32)]),
        ),
        compiler_params=pltpu.CompilerParams(
            dimension_semantics=("parallel", "arbitrary"),
            vmem_limit_bytes=vmem_limit,
        ),
        cost_estimate=cost,
    )(x, tgt)

    sq = jnp.sum(partials[:, 0, 0])
    ab = jnp.sum(partials[:, 0, 1])
    # ScaledMSELoss: sum(diff^2) / (sum(|diff|) + eps)   (scalar glue in JAX)
    return sq / (ab + eps)


def get_target_ref(feat_nchw):
    """Plain-JAX equivalent of StyleLoss.get_target (builds the target buffer)."""
    B, C, H, W = feat_nchw.shape
    mat = feat_nchw.reshape(B, C, H * W)
    return jnp.einsum("bcn,bdn->bcd", mat, mat) / (H * W)


def _ref_loss(x_nchw, target, eps=1e-8):
    g = get_target_ref(x_nchw)
    diff = g - target
    return jnp.sum(diff ** 2) / (jnp.sum(jnp.abs(diff)) + eps)


if __name__ == "__main__":
    key = jax.random.PRNGKey(0)
    k1, k2, k3 = jax.random.split(key, 3)
    B, C, H, W = 2, 4, 16, 16

    # input feature map and the "style" feature map from which the target
    # Gram buffer is built deterministically in-script (as in __init__).
    x = jax.random.normal(k1, (B, C, H, W), dtype=jnp.float32)
    style_feat = jax.random.normal(k2, (B, C, H, W), dtype=jnp.float32)
    target = get_target_ref(style_feat)
    ref = _ref_loss(x, target)

    # single-K-tile path (HW = 256, lane-dense, no accumulator scratch)
    loss = jax.block_until_ready(style_loss(x, target))
    assert jnp.allclose(loss, ref, rtol=1e-5, atol=1e-6), (loss, ref)

    # multi-K-tile path (forces tk=128, kt=2, accumulator scratch)
    loss_tiled = jax.block_until_ready(style_loss(x, target, tk_override=128))
    assert jnp.allclose(loss_tiled, ref, rtol=1e-5, atol=1e-6), (loss_tiled, ref)

    # ragged-HW path (HW = 240 -> tk=128, kt=2, in-kernel tail mask, no pad)
    x2 = jax.random.normal(k3, (B, C, 16, 15), dtype=jnp.float32)
    target2 = get_target_ref(style_feat[..., :15])
    ref2 = _ref_loss(x2, target2)
    loss2 = jax.block_until_ready(style_loss(x2, target2))
    assert jnp.allclose(loss2, ref2, rtol=1e-5, atol=1e-6), (loss2, ref2)

    print("KERNEL_OK")
</pallas_src>

<mosaic_0001>
module attributes {stable_mosaic.version = 11 : i64} {
  func.func @_style_loss_kernel(%arg0: i32, %arg1: i32, %arg2: memref<1x4x256xf32, #tpu.memory_space<vmem>>, %arg3: memref<1x4x4xf32, #tpu.memory_space<vmem>>, %arg4: memref<1x8x128xf32, #tpu.memory_space<vmem>>) attributes {dimension_semantics = [#tpu.dimension_semantics<parallel>, #tpu.dimension_semantics<arbitrary>], iteration_bounds = array<i64: 2, 1>, scalar_prefetch = 0 : i64, scratch_operands = 0 : i64, tpu.core_type = #tpu.core_type<tc>, window_params = [{transform_indices = @transform_0, window_bounds = array<i64: 1, 4, 256>}, {transform_indices = @transform_1, window_bounds = array<i64: 1, 4, 4>}, {transform_indices = @transform_2, window_bounds = array<i64: 1, 8, 128>}]} {
    %c0 = arith.constant 0 : index
    %c0_0 = arith.constant 0 : index
    %c0_1 = arith.constant 0 : index
    %0 = vector.load %arg2[%c0, %c0_0, %c0_1] : memref<1x4x256xf32, #tpu.memory_space<vmem>>, vector<1x4x256xf32>
    %1 = vector.shape_cast %0 : vector<1x4x256xf32> to vector<4x256xf32>
    %cst = arith.constant dense<0.000000e+00> : vector<4x4xf32>
    %2 = tpu.matmul %1, %1, %cst {dimension_numbers = #tpu.dot_dimension_numbers<[1], [1], [0], [0], [0, 0, 1, 0], [], []>} : vector<4x256xf32>, vector<4x256xf32>, vector<4x4xf32> -> vector<4x4xf32>
    %cst_2 = arith.constant 3.906250e-03 : f32
    %3 = vector.broadcast %cst_2 : f32 to vector<4x4xf32>
    %4 = arith.mulf %2, %3 : vector<4x4xf32>
    %c0_3 = arith.constant 0 : index
    %c0_4 = arith.constant 0 : index
    %c0_5 = arith.constant 0 : index
    %5 = vector.load %arg3[%c0_3, %c0_4, %c0_5] : memref<1x4x4xf32, #tpu.memory_space<vmem>>, vector<1x4x4xf32>
    %6 = vector.shape_cast %5 : vector<1x4x4xf32> to vector<4x4xf32>
    %7 = arith.subf %4, %6 : vector<4x4xf32>
    %8 = arith.mulf %7, %7 : vector<4x4xf32>
    %9 = vector.shape_cast %8 : vector<4x4xf32> to vector<1x4x4xf32>
    %cst_6 = arith.constant dense<0.000000e+00> : vector<1xf32>
    %10 = vector.multi_reduction <add>, %9, %cst_6 [1, 2] : vector<1x4x4xf32> to vector<1xf32>
    %11 = vector.shape_cast %10 : vector<1xf32> to vector<1x1x1xf32>
    %12 = vector.extract %11[0, 0, 0] : f32 from vector<1x1x1xf32>
    %13 = math.absf %7 : vector<4x4xf32>
    %14 = vector.shape_cast %13 : vector<4x4xf32> to vector<1x4x4xf32>
    %cst_7 = arith.constant dense<0.000000e+00> : vector<1xf32>
    %15 = vector.multi_reduction <add>, %14, %cst_7 [1, 2] : vector<1x4x4xf32> to vector<1xf32>
    %16 = vector.shape_cast %15 : vector<1xf32> to vector<1x1x1xf32>
    %17 = vector.extract %16[0, 0, 0] : f32 from vector<1x1x1xf32>
    %18 = tpu.iota {dimensions = array<i32: 1>} : vector<8x128xi32>
    %c0_i32 = arith.constant 0 : i32
    %19 = vector.broadcast %c0_i32 : i32 to vector<8x128xi32>
    %20 = arith.cmpi eq, %18, %19 : vector<8x128xi32>
    %c1_i32 = arith.constant 1 : i32
    %21 = vector.broadcast %c1_i32 : i32 to vector<8x128xi32>
    %22 = arith.cmpi eq, %18, %21 : vector<8x128xi32>
    %cst_8 = arith.constant 0.000000e+00 : f32
    %23 = vector.broadcast %17 : f32 to vector<8x128xf32>
    %24 = vector.broadcast %cst_8 : f32 to vector<8x128xf32>
    %25 = arith.select %22, %23, %24 : vector<8x128xi1>, vector<8x128xf32>
    %26 = vector.broadcast %12 : f32 to vector<8x128xf32>
    %27 = arith.select %20, %26, %25 : vector<8x128xi1>, vector<8x128xf32>
    %c0_9 = arith.constant 0 : index
    %c0_10 = arith.constant 0 : index
    %c0_11 = arith.constant 0 : index
    %28 = vector.load %arg4[%c0_9, %c0_10, %c0_11] : memref<1x8x128xf32, #tpu.memory_space<vmem>>, vector<1x8x128xf32>
    %29 = vector.shape_cast %28 : vector<1x8x128xf32> to vector<8x128xf32>
    %30 = vector.shape_cast %27 : vector<8x128xf32> to vector<1x8x128xf32>
    tpu.vector_store %arg4[%c0_9, %c0_10, %c0_11], %30 {strides = array<i32>} : memref<1x8x128xf32, #tpu.memory_space<vmem>>, vector<1x8x128xf32>,
    return
  }
  func.func @transform_0(%arg0: i32, %arg1: i32) -> (i32, i32, i32) {
    %c0_i32 = arith.constant 0 : i32
    %c0_i32_0 = arith.constant 0 : i32
    return %arg0, %c0_i32, %arg1 : i32, i32, i32
  }
  func.func @transform_1(%arg0: i32, %arg1: i32) -> (i32, i32, i32) {
    %c0_i32 = arith.constant 0 : i32
    %c0_i32_0 = arith.constant 0 : i32
    %c0_i32_1 = arith.constant 0 : i32
    return %arg0, %c0_i32, %c0_i32_0 : i32, i32, i32
  }
  func.func @transform_2(%arg0: i32, %arg1: i32) -> (i32, i32, i32) {
    %c0_i32 = arith.constant 0 : i32
    %c0_i32_0 = arith.constant 0 : i32
    %c0_i32_1 = arith.constant 0 : i32
    return %arg0, %c0_i32, %c0_i32_0 : i32, i32, i32
  }
}

</mosaic_0001>

<llo_original>
// kernel: tpu_custom_call.1
$region0: #{tpu_custom_call.1}
  #allocation0 [shape = 'u32[]', space=smem, size = 0x4, offset = 0x4, fixed_abs, tag = 'smem constant byte address 0x4 - core index']
  #allocation1 [shape = 'u32[144,128]{1,0:T(1,128)}', space=vmem, size = 0x12000, scoped, tag = 'internal scratch']
  %s0 = inlined_call_operand.hbm [shape: f32[2,4,256], index: 0, kind: input, shape index: {}]
  %s1 = inlined_call_operand.hbm [shape: f32[2,4,4], index: 1, kind: input, shape index: {}]
  %s2 = inlined_call_operand.hbm [shape: f32[2,8,128], index: 2, kind: output, shape index: {}]
  %s3 = sld [smem:[#allocation0]]
  $region49: #{tpu_custom_call.1} parent=0
    _
  %s5 = ssub.s32 1, %s3
  %s6 = scalar_select 0, %s5, %s3
  $region1: #{tpu_custom_call.1} parent=0
    #allocation2 [shape = 'u8[8192]{0}', space=vmem, size = 0x2000, scoped, tag = 'input window, operand 0']
    #allocation3 [shape = 's32[2]{0}', space=sflag, size = 0x8, scoped, tag = 'scoped memory for tpu_custom_call.1']
    #allocation4 [shape = 's32[2]{0}', space=sflag, size = 0x8, scoped, tag = 'scoped memory for tpu_custom_call.1']
    #allocation5 [shape = 'u8[4096]{0}', space=vmem, size = 0x1000, scoped, tag = 'input window, operand 1']
    #allocation6 [shape = 's32[2]{0}', space=sflag, size = 0x8, scoped, tag = 'scoped memory for tpu_custom_call.1']
    #allocation7 [shape = 'u8[8192]{0}', space=vmem, size = 0x2000, scoped, tag = 'output window, operand 0']
    %7 = vsyncpa [#allocation3], 0
    %s8 = scalar_lea.sflag [#allocation3], 1
    %9 = vsyncpa %s8, 0
    %10 = vsyncpa [#allocation6], 0
    %s11 = scalar_lea.sflag [#allocation6], 1
    %12 = vsyncpa %s11, 0
    %13 = vsyncpa [#allocation4], 0
    %s14 = scalar_lea.sflag [#allocation4], 1
    %15 = vsyncpa %s14, 0
    loop: start=0, step=1, limit=4
    $region2: #{tpu_custom_call.1} parent=1 // loop_pre_header
      _
    $region3: #{tpu_custom_call.1} parent=1 // loop_header
      %s17 = sphi 0, %s21
      %p18 = scmp.ge.s32.totalorder %s17, 4
      %s24 = sphi 0, %s36
      %s25 = sphi 0, %s32
      %s26 = sphi 0, %s24
      %s27 = sphi 0, %s25
      %s28 = sphi 0, %s26
      %s29 = sphi 0, %s27
      %s41 = sphi 0, %s43
      %s44 = sphi 0, %s41
      %s45 = sphi 0, %s44
      %s61 = sphi 0, %s45
      %s67 = sphi 0, %s69
      %s70 = sphi 0, %s67
      %s71 = sphi 0, %s70
      %s87 = sphi 0, %s71
      %s93 = sphi 0, %s95
      %s96 = sphi 0, %s93
      %s97 = sphi 0, %s96
      %s113 = sphi 0, %s97
    $region4: #{tpu_custom_call.1} parent=1 // loop_header_branch
      %20 = sbr.rel (%p18) target = $region8
    $region5: #{tpu_custom_call.1} parent=1 // loop_body
      %s22 = ssub.s32 %s17, 1
      %s23 = ssub.s32 %s17, 2
      %s30 = sadd.s32 1, %s25
      %p31 = scmp.ge.s32.totalorder %s30, 1
      %s32 = scalar_select %p31, 0, %s30
      %s33 = sadd.s32 1, %s24
      %s34 = scalar_select %p31, %s33, %s24
      %p35 = scmp.ge.s32.totalorder %s34, 2
      %s36 = scalar_select %p35, 0, %s34
      %s37 = ssub.s32 %s24, %s36
      %s38 = ssub.s32 %s25, %s32
      %s39 = sor.u32 %s37, %s38
      %p40 = scmp.eq.s32.totalorder %s39, 0
      %s42 = sadd.s32 %s41, 1
      %s43 = scalar_select %p40, %s41, %s42
      %p46 = pneg %p40
      %p47 = scmp.eq.s32.totalorder %s17, 1
      %p48 = por %p46, %p47
      %p49 = scmp.ne.s32.totalorder %s41, %s44
      %p50 = scmp.eq.s32.totalorder %s17, 0
      %p51 = por %p49, %p50
      %p52 = scmp.ne.s32.totalorder %s41, %s44
      %p53 = scmp.eq.s32.totalorder %s22, 1
      %p54 = por %p52, %p53
      %p55 = scmp.ne.s32.totalorder %s44, %s45
      %p56 = scmp.eq.s32.totalorder %s22, 0
      %p57 = por %p55, %p56
      %p58 = scmp.ne.s32.totalorder %s44, %s45
      %p59 = scmp.eq.s32.totalorder %s23, 1
      %p60 = por %p58, %p59
      %p62 = scmp.ne.s32.totalorder %s45, %s61
      %p63 = scmp.eq.s32.totalorder %s23, 0
      %p64 = por %p62, %p63
      %s65 = ssub.s32 %s24, %s36
      %p66 = scmp.eq.s32.totalorder %s65, 0
      %s68 = sadd.s32 %s67, 1
      %s69 = scalar_select %p66, %s67, %s68
      %p72 = pneg %p66
      %p73 = scmp.eq.s32.totalorder %s17, 1
      %p74 = por %p72, %p73
      %p75 = scmp.ne.s32.totalorder %s67, %s70
      %p76 = scmp.eq.s32.totalorder %s17, 0
      %p77 = por %p75, %p76
      %p78 = scmp.ne.s32.totalorder %s67, %s70
      %p79 = scmp.eq.s32.totalorder %s22, 1
      %p80 = por %p78, %p79
      %p81 = scmp.ne.s32.totalorder %s70, %s71
      %p82 = scmp.eq.s32.totalorder %s22, 0
      %p83 = por %p81, %p82
      %p84 = scmp.ne.s32.totalorder %s70, %s71
      %p85 = scmp.eq.s32.totalorder %s23, 1
      %p86 = por %p84, %p85
      %p88 = scmp.ne.s32.totalorder %s71, %s87
      %p89 = scmp.eq.s32.totalorder %s23, 0
      %p90 = por %p88, %p89
      %s91 = ssub.s32 %s24, %s36
      %p92 = scmp.eq.s32.totalorder %s91, 0
      %s94 = sadd.s32 %s93, 1
      %s95 = scalar_select %p92, %s93, %s94
      %p98 = pneg %p92
      %p99 = scmp.eq.s32.totalorder %s17, 1
      %p100 = por %p98, %p99
      %p101 = scmp.ne.s32.totalorder %s93, %s96
      %p102 = scmp.eq.s32.totalorder %s17, 0
      %p103 = por %p101, %p102
      %p104 = scmp.ne.s32.totalorder %s93, %s96
      %p105 = scmp.eq.s32.totalorder %s22, 1
      %p106 = por %p104, %p105
      %p107 = scmp.ne.s32.totalorder %s96, %s97
      %p108 = scmp.eq.s32.totalorder %s22, 0
      %p109 = por %p107, %p108
      %p110 = scmp.ne.s32.totalorder %s96, %s97
      %p111 = scmp.eq.s32.totalorder %s23, 1
      %p112 = por %p110, %p111
      %p114 = scmp.ne.s32.totalorder %s97, %s113
      %p115 = scmp.eq.s32.totalorder %s23, 0
      %p116 = por %p114, %p115
      %p117 = scmp.le.s32.totalorder 1, %s17
      %p118 = scmp.lt.s32.totalorder %s17, 3
      %p119 = pnand %p117, %p118
      %p120 = pneg %p119
      // Predicated region
      $region9: #{tpu_custom_call.1} parent=5 // pred_check
        _
      $region10: #{tpu_custom_call.1} parent=5 // pred_check_branch
        %122 = sbr.rel (%p119) target = $region12
      $region11: #{tpu_custom_call.1} parent=5 // pred_region
        %s123 = ssub.s32 %s17, 1
      $region12: #{tpu_custom_call.1} parent=5 // pred_fallthru
        _
      %p124 = scmp.lt.s32.totalorder %s17, 2
      // Predicated region
      $region13: #{tpu_custom_call.1} parent=5 // pred_check
        %p125 = pneg %p124
      $region14: #{tpu_custom_call.1} parent=5 // pred_check_branch
        %127 = sbr.rel (%p125) target = $region16
      $region15: #{tpu_custom_call.1} parent=5 // pred_region
        // Predicated region
        $region17: #{tpu_custom_call.1} parent=15 // pred_check
          %p128 = pneg %p51
        $region18: #{tpu_custom_call.1} parent=15 // pred_check_branch
          %130 = sbr.rel (%p128) target = $region20
        $region19: #{tpu_custom_call.1} parent=15 // pred_region
          %s131 = sand.u32 %s41, 1
          %s132 = scalar_lea.sflag [#allocation3], %s131
          %s133 = sand.u32 %s41, 1
          %s134 = smul.addr %s133, 8
          %s135 = scalar_lea.vmem [#allocation2], %s134
          %s136 = smul.u32 2, %s25
          %s138 = ssub.s32 128, 128
          %139 = vsyncadd %s132, %s138
          %s140 = smul.addr %s24, 2
          %s141 = sadd.s32 %s136, %s140
          %s142 = smul.addr %s141, 64
          %s143 = scalar_lea.hbm %s0, %s142
          %s145 = sshll.u32 %s135, 4
          %s146 = int_to_ptr.vmem [resolvable:$true] %s145
          %148 = dma.hbm_to_vmem [thread:$0]  %s143, 128, %s146, %s132
        $region20: #{tpu_custom_call.1} parent=15 // pred_fallthru
          _
        // Predicated region
        $region21: #{tpu_custom_call.1} parent=15 // pred_check
          %p149 = pneg %p77
        $region22: #{tpu_custom_call.1} parent=15 // pred_check_branch
          %151 = sbr.rel (%p149) target = $region24
        $region23: #{tpu_custom_call.1} parent=15 // pred_region
          %s152 = sand.u32 %s67, 1
          %s153 = scalar_lea.sflag [#allocation6], %s152
          %s154 = sand.u32 %s67, 1
          %s155 = smul.addr %s154, 4
          %s156 = scalar_lea.vmem [#allocation5], %s155
          %s158 = ssub.s32 64, 64
          %159 = vsyncadd %s153, %s158
          %s160 = smul.addr %s24, 64
          %s161 = scalar_lea.hbm %s1, %s160
          %s163 = sshll.u32 %s156, 4
          %s164 = int_to_ptr.vmem [resolvable:$true] %s163
          %166 = dma.hbm_to_vmem [thread:$0]  %s161, 64, %s164, %s153
        $region24: #{tpu_custom_call.1} parent=15 // pred_fallthru
          _
      $region16: #{tpu_custom_call.1} parent=5 // pred_fallthru
        _
      %p167 = scmp.le.s32.totalorder 1, %s17
      %p168 = scmp.lt.s32.totalorder %s17, 3
      %p169 = pnand %p167, %p168
      %p170 = pneg %p169
      // Predicated region
      $region25: #{tpu_custom_call.1} parent=5 // pred_check
        _
      $region26: #{tpu_custom_call.1} parent=5 // pred_check_branch
        %172 = sbr.rel (%p169) target = $region28
      $region27: #{tpu_custom_call.1} parent=5 // pred_region
        %s173 = ssub.s32 %s17, 1
        %s174 = sand.u32 %s44, 1
        %s175 = scalar_lea.sflag [#allocation3], %s174
        %s176 = sand.u32 %s44, 1
        %s177 = smul.addr %s176, 8
        %s178 = scalar_lea.vmem [#allocation2], %s177
        // Predicated region
        $region29: #{tpu_custom_call.1} parent=27 // pred_check
          %p179 = pneg %p57
        $region30: #{tpu_custom_call.1} parent=27 // pred_check_branch
          %181 = sbr.rel (%p179) target = $region32
        $region31: #{tpu_custom_call.1} parent=27 // pred_region
          %182 = dma.done %s175, 128
        $region32: #{tpu_custom_call.1} parent=27 // pred_fallthru
          _
        %s183 = sand.u32 %s70, 1
        %s184 = scalar_lea.sflag [#allocation6], %s183
        %s185 = sand.u32 %s70, 1
        %s186 = smul.addr %s185, 4
        %s187 = scalar_lea.vmem [#allocation5], %s186
        // Predicated region
        $region33: #{tpu_custom_call.1} parent=27 // pred_check
          %p188 = pneg %p83
        $region34: #{tpu_custom_call.1} parent=27 // pred_check_branch
          %190 = sbr.rel (%p188) target = $region36
        $region35: #{tpu_custom_call.1} parent=27 // pred_region
          %191 = dma.done %s184, 64
        $region36: #{tpu_custom_call.1} parent=27 // pred_fallthru
          _
        %s192 = sand.u32 %s44, 1
        %s193 = scalar_lea.sflag [#allocation3], %s192
        %s194 = sand.u32 %s44, 1
        %s195 = smul.addr %s194, 8
        %s196 = scalar_lea.vmem [#allocation2], %s195
        %p197 = pneg %p57
        %p198 = pneg %p54
        %s199 = sand.u32 %s70, 1
        %s200 = scalar_lea.sflag [#allocation6], %s199
        %s201 = sand.u32 %s70, 1
        %s202 = smul.addr %s201, 4
        %s203 = scalar_lea.vmem [#allocation5], %s202
        %p204 = pneg %p83
        %p205 = pneg %p80
        %p206 = pneg %p109
        %p207 = pneg %p106
        %s208 = sand.u32 %s96, 1
        %s209 = scalar_lea.sflag [#allocation4], %s208
        %s210 = sand.u32 %s96, 1
        %s211 = smul.addr %s210, 8
        %s212 = scalar_lea.vmem [#allocation7], %s211
        %s213 = smul.u32 2, %s27
        %v214 = vld [vmem:[%s178] sm:$0xff]
        %v216 = vcombine.high %v214, %v214
        %218 = vmatprep.subr.mxu0 %v216
        %219 = vmatpush1.xpose.msra.mxu0 %v214
        %220 = vmatprep.subr.mxu0 0.0
        %221 = vmatpush1.xpose.msra.mxu0 0.0
        %222 = vmatprep.subr.mxu0 0.0
        %223 = vmatpush1.xpose.msra.mxu0 0.0
        %224 = vmatprep.subr.mxu0 0.0
        %225 = vmatpush1.xpose.msra.mxu0 0.0
        %226 = vmatprep.subr.mxu0 0.0
        %227 = vmatpush1.xpose.msra.mxu0 0.0
        %228 = vmatprep.subr.mxu0 0.0
        %229 = vmatpush1.xpose.msra.mxu0 0.0
        %230 = vmatprep.subr.mxu0 0.0
        %231 = vmatpush1.xpose.msra.mxu0 0.0
        %232 = vmatprep.subr.mxu0 0.0
        %233 = vmatpush1.xpose.msra.mxu0 0.0
        %234 = vmatprep.subr.mxu0 0.0
        %235 = vmatpush1.xpose.msra.mxu0 0.0
        %236 = vmatprep.subr.mxu0 0.0
        %237 = vmatpush1.xpose.msra.mxu0 0.0
        %238 = vmatprep.subr.mxu0 0.0
        %239 = vmatpush1.xpose.msra.mxu0 0.0
        %240 = vmatprep.subr.mxu0 0.0
        %241 = vmatpush1.xpose.msra.mxu0 0.0
        %242 = vmatprep.subr.mxu0 0.0
        %243 = vmatpush1.xpose.msra.mxu0 0.0
        %244 = vmatprep.subr.mxu0 0.0
        %245 = vmatpush1.xpose.msra.mxu0 0.0
        %246 = vmatprep.subr.mxu0 0.0
        %247 = vmatpush1.xpose.msra.mxu0 0.0
        %248 = vmatprep.subr.mxu0 0.0
        %249 = vmatpush1.xpose.msra.mxu0 0.0
        %250 = vmatprep.subr.mxu0 0.0
        %251 = vmatpush1.xpose.msra.mxu0 0.0
        %252 = vmatprep.subr.mxu0 0.0
        %253 = vmatpush1.xpose.msra.mxu0 0.0
        %254 = vmatprep.subr.mxu0 0.0
        %255 = vmatpush1.xpose.msra.mxu0 0.0
        %256 = vmatprep.subr.mxu0 0.0
        %257 = vmatpush1.xpose.msra.mxu0 0.0
        %258 = vmatprep.subr.mxu0 0.0
        %259 = vmatpush1.xpose.msra.mxu0 0.0
        %260 = vmatprep.subr.mxu0 0.0
        %261 = vmatpush1.xpose.msra.mxu0 0.0
        %262 = vmatprep.subr.mxu0 0.0
        %263 = vmatpush1.xpose.msra.mxu0 0.0
        %264 = vmatprep.subr.mxu0 0.0
        %265 = vmatpush1.xpose.msra.mxu0 0.0
        %266 = vmatprep.subr.mxu0 0.0
        %267 = vmatpush1.xpose.msra.mxu0 0.0
        %268 = vmatprep.subr.mxu0 0.0
        %269 = vmatpush1.xpose.msra.mxu0 0.0
        %270 = vmatprep.subr.mxu0 0.0
        %271 = vmatpush1.xpose.msra.mxu0 0.0
        %272 = vmatprep.subr.mxu0 0.0
        %273 = vmatpush1.xpose.msra.mxu0 0.0
        %274 = vmatprep.subr.mxu0 0.0
        %275 = vmatpush1.xpose.msra.mxu0 0.0
        %276 = vmatprep.subr.mxu0 0.0
        %277 = vmatpush1.xpose.msra.mxu0 0.0
        %278 = vmatprep.subr.mxu0 0.0
        %279 = vmatpush1.xpose.msra.mxu0 0.0
        %280 = vmatprep.subr.mxu0 0.0
        %281 = vmatpush1.xpose.msra.mxu0 0.0
        %282 = vmatprep.mubr.f32.mxu0 %v216
        %283 = vmatmul.mubr.f32.gmra.mrb[0].mxu0 %v214
        %v284 = vpop.f32.mrb[0].mxu0
        %v285 = vadd.f32 0.0, %v284
        %v286 = vpop.f32.mrb[0].mxu0
        %287 = vdwg.mxu0
        %v288 = vmul.f32 %v285, 0.00390625
        %v289 = vld [vmem:[%s187] sm:$0xf]
        %v290 = vsub.f32 %v288, %v289
        %v291 = vmul.f32 %v290, %v290
        %vm292 = vcmask 27648
        %v293 = vsel %vm292, %v291, 0.0
        %294 = vadd.xlane.f32.xlu0 %v293
        %v295 = vpop.xlane.xlu0 %294
        %v296 = vrot.slane %v295, 4
        %v297 = vadd.f32 %v295, %v296
        %v298 = vrot.slane %v297, 2
        %v299 = vadd.f32 %v297, %v298
        %v300 = vrot.slane %v299, 1
        %v301 = vadd.f32 %v299, %v300
        %s302 = vtos %v301
        %v303 = vand.u32 2147483647, %v290
        %v304 = vsel %vm292, %v303, 0.0
        %305 = vadd.xlane.f32.xlu0 %v304
        %v306 = vpop.xlane.xlu0 %305
        %v307 = vrot.slane %v306, 4
        %v308 = vadd.f32 %v306, %v307
        %v309 = vrot.slane %v308, 2
        %v310 = vadd.f32 %v308, %v309
        %v311 = vrot.slane %v310, 1
        %v312 = vadd.f32 %v310, %v311
        %s313 = vtos %v312
        %v314 = vlaneseq
        %v315 = vand.u32 %v314, 127
        %vm316 = vcmp.eq.s32.totalorder %v315, 0
        %vm317 = vcmp.eq.s32.totalorder %v315, 1
        %v318 = vstv %s313
        %v319 = vsel %vm317, %v318, 0.0
        %v320 = vstv %s302
        %v321 = vsel %vm316, %v320, %v319
        %322 = vst [vmem:[%s212] sm:$0xff] %v321
        %s323 = sand.u32 %s96, 1
        %s324 = scalar_lea.sflag [#allocation4], %s323
        %s325 = sand.u32 %s96, 1
        %s326 = smul.addr %s325, 8
        %s327 = scalar_lea.vmem [#allocation7], %s326
        // Predicated region
        $region37: #{tpu_custom_call.1} parent=27 // pred_check
          %p328 = pneg %p106
        $region38: #{tpu_custom_call.1} parent=27 // pred_check_branch
          %330 = sbr.rel (%p328) target = $region40
        $region39: #{tpu_custom_call.1} parent=27 // pred_region
          %s332 = ssub.s32 128, 128
          %333 = vsyncadd %s324, %s332
          %s334 = smul.addr %s26, 128
          %s335 = scalar_lea.hbm %s2, %s334
          %s337 = sshll.u32 %s327, 4
          %s338 = int_to_ptr.vmem [resolvable:$true] %s337
          %340 = dma.vmem_to_hbm [thread:$0]  %s338, 128, %s335, %s324
        $region40: #{tpu_custom_call.1} parent=27 // pred_fallthru
          _
      $region28: #{tpu_custom_call.1} parent=5 // pred_fallthru
        _
      %p341 = scmp.le.s32.totalorder 2, %s17
      // Predicated region
      $region41: #{tpu_custom_call.1} parent=5 // pred_check
        %p342 = pneg %p341
      $region42: #{tpu_custom_call.1} parent=5 // pred_check_branch
        %344 = sbr.rel (%p342) target = $region44
      $region43: #{tpu_custom_call.1} parent=5 // pred_region
        %s345 = ssub.s32 %s17, 2
        // Predicated region
        $region45: #{tpu_custom_call.1} parent=43 // pred_check
          %p346 = pneg %p112
        $region46: #{tpu_custom_call.1} parent=43 // pred_check_branch
          %348 = sbr.rel (%p346) target = $region48
        $region47: #{tpu_custom_call.1} parent=43 // pred_region
          %s349 = sand.u32 %s97, 1
          %s350 = scalar_lea.sflag [#allocation4], %s349
          %s351 = sand.u32 %s97, 1
          %s352 = smul.addr %s351, 8
          %s353 = scalar_lea.vmem [#allocation7], %s352
          %354 = dma.done %s350, 128
        $region48: #{tpu_custom_call.1} parent=43 // pred_fallthru
          _
      $region44: #{tpu_custom_call.1} parent=5 // pred_fallthru
        _
    $region6: #{tpu_custom_call.1} parent=1 // loop_footer
      %s21 = sadd.s32 1, %s17
    $region7: #{tpu_custom_call.1} parent=1 // loop_footer_branch
      %16 = sbr.rel target = $region3
    $region8: #{tpu_custom_call.1} parent=1 // loop_exit
      _
    %355 = vsyncpa [#allocation3], 1
    %s356 = scalar_lea.sflag [#allocation3], 1
    %357 = vsyncpa %s356, 1
    %358 = vsyncpa [#allocation6], 1
    %s359 = scalar_lea.sflag [#allocation6], 1
    %360 = vsyncpa %s359, 1
    %361 = vsyncpa [#allocation4], 1
    %s362 = scalar_lea.sflag [#allocation4], 1
    %363 = vsyncpa %s362, 1

</llo_original>
